<compile_context>
chip_gen: v5e
topology: v5e:2x2
jax: 0.10.0
libtpu: 0.0.40
codegen_flags: <defaults>
</compile_context>

<pallas_src>
import math

import jax
import jax.numpy as jnp
from jax.experimental import pallas as pl
from jax.experimental.pallas import tpu as pltpu


# ------------------ kernel: HBM-bound lane-dense broadcast add ------------------- #
def _bcast_add_kernel(x_ref, pe_ref, o_ref):
    # x_ref: (tile_r, ...), pe_ref: (1, ...) -> pe broadcasts over the B*H row axis.
    o_ref[...] = (x_ref[...].astype(jnp.float32) + pe_ref[...]).astype(o_ref.dtype)


# --------------------------------- wrapper --------------------------------------- #
def rel_temporal_encoding(x, t, emb_table, w, b, rte_ratio):
    """x: (B, H, T, D); t: (T,) int; emb_table: (max_len, D); w: (D, D) [out,in]; b: (D,)."""
    B, H, T, D = x.shape
    max_len = emb_table.shape[0]

    # pe = Linear(Embedding(t * ratio)): tiny, done in plain XLA (fused gather+matmul+bias).
    t_idx = jnp.clip(t.astype(jnp.int32) * rte_ratio, 0, max_len - 1)
    emb_rows = jnp.take(emb_table, t_idx, axis=0)                        # (T, D)
    pe = jax.lax.dot_general(
        emb_rows.astype(jnp.float32), w.astype(jnp.float32),
        dimension_numbers=(((1,), (1,)), ((), ())),                      # emb @ w.T, no transpose op
        preferred_element_type=jnp.float32,
    ) + b.astype(jnp.float32)                                            # (T, D) f32

    # Layout: lane-dense (B*H, T*D) slab only when the flattened last dim is a 128-multiple
    # (otherwise the full-width-store win disappears); fall back to (B*H, T, D) full blocks.
    R = B * H
    if (T * D) % 128 == 0:
        x_blk = x.reshape(R, T * D)            # contiguous-dim merge, no data movement
        pe_blk = pe.reshape(1, T * D)
        row_shape = (T * D,)
    else:
        x_blk = x.reshape(R, T, D)
        pe_blk = pe.reshape(1, T, D)
        row_shape = (T, D)

    # Row-tile sizing: ~4 MiB blocks (near HBM roofline on v5e/v6e, low fixed-overhead tax
    # on v7x), dtype-aware sublane rounding, and >=2 (ideally >=4) grid steps when R allows
    # so v7x's two TensorCores both get work and the pipeline can overlap DMA with compute.
    itemsize = x.dtype.itemsize
    sub = {4: 8, 2: 16, 1: 32}.get(itemsize, 8)
    bytes_per_row = T * D * itemsize
    TARGET_BLOCK_BYTES = 4 << 20
    if R <= sub:
        tile_r = R                             # full-dim block: always a legal tiling
    else:
        tile_r = max(sub, (TARGET_BLOCK_BYTES // max(bytes_per_row, 1)) // sub * sub)
        steps = min(4, R // sub)
        if steps >= 2:
            cap = pl.cdiv(pl.cdiv(R, steps), sub) * sub
            tile_r = min(tile_r, cap)
        tile_r = min(tile_r, R)
    grid_r = pl.cdiv(R, tile_r)

    nz = len(row_shape)
    out_blk = pl.pallas_call(
        _bcast_add_kernel,
        out_shape=jax.ShapeDtypeStruct(x_blk.shape, x.dtype),
        grid=(grid_r,),
        in_specs=[
            pl.BlockSpec((tile_r,) + row_shape, lambda i: (i,) + (0,) * nz),
            pl.BlockSpec((1,) + row_shape, lambda i: (0,) * (1 + nz)),   # resident pe block
        ],
        out_specs=pl.BlockSpec((tile_r,) + row_shape, lambda i: (i,) + (0,) * nz),
        input_output_aliases={0: 0},                                     # reuse x's HBM buffer
        cost_estimate=pl.CostEstimate(
            flops=R * T * D,
            transcendentals=0,
            bytes_accessed=2 * R * T * D * itemsize + T * D * 4,
        ),
        compiler_params=pltpu.CompilerParams(
            dimension_semantics=("parallel",),        # v7x: shard row tiles over the 2 TCs
            vmem_limit_bytes=32 * 1024 * 1024,        # 4x ~4 MiB buffers fit on v5e/v6e/v7x
        ),
    )(x_blk, pe_blk)

    return out_blk.reshape(B, H, T, D)


# ------------------------------ parameter setup ---------------------------------- #
def make_params(n_hid, max_len, key):
    # Sinusoidal embedding table (matches the PyTorch __init__, non-trainable).
    position = jnp.arange(0.0, max_len, dtype=jnp.float32)[:, None]
    div_term = jnp.exp(
        jnp.arange(0, n_hid, 2, dtype=jnp.float32) * -(math.log(10000.0) / n_hid)
    )
    emb = jnp.zeros((max_len, n_hid), jnp.float32)
    emb = emb.at[:, 0::2].set(jnp.sin(position * div_term) / math.sqrt(n_hid))
    emb = emb.at[:, 1::2].set(jnp.cos(position * div_term) / math.sqrt(n_hid))

    # Linear(n_hid, n_hid) weights, deterministic synthetic init ((out, in) like nn.Linear).
    kw, kb = jax.random.split(key)
    w = jax.random.normal(kw, (n_hid, n_hid), jnp.float32) * 0.02
    b = jax.random.normal(kb, (n_hid,), jnp.float32) * 0.02
    return emb, w, b


# ----------------------------------- main ----------------------------------------- #
if __name__ == "__main__":
    n_hid = 32
    max_len = 100
    RTE_ratio = 2
    B, H, T, D = 2, 4, 8, n_hid

    key = jax.random.PRNGKey(0)
    k_params, k_x, k_t = jax.random.split(key, 3)

    emb_table, w, b = make_params(n_hid, max_len, k_params)
    x = jax.random.normal(k_x, (B, H, T, D), jnp.float32)
    t = jax.random.randint(k_t, (T,), 0, max_len // RTE_ratio, dtype=jnp.int32)

    fn = jax.jit(lambda x_, t_: rel_temporal_encoding(x_, t_, emb_table, w, b, RTE_ratio))
    out = jax.block_until_ready(fn(x, t))

    # Pure-JAX reference of the PyTorch forward.
    pe_ref = emb_table[t * RTE_ratio] @ w.T + b                        # (T, D)
    ref = x + pe_ref[None, None, :, :]                                 # (B, H, T, D)

    assert out.shape == x.shape and out.dtype == x.dtype
    assert jnp.allclose(out, ref, atol=1e-5, rtol=1e-5)
    print("KERNEL_OK")
</pallas_src>

<mosaic_0001>
module attributes {stable_mosaic.version = 11 : i64} {
  func.func @_bcast_add_kernel(%arg0: i32, %arg1: memref<8x256xf32, #tpu.memory_space<vmem>>, %arg2: memref<1x256xf32, #tpu.memory_space<vmem>>, %arg3: memref<8x256xf32, #tpu.memory_space<vmem>>) attributes {dimension_semantics = [#tpu.dimension_semantics<parallel>], iteration_bounds = array<i64: 1>, scalar_prefetch = 0 : i64, scratch_operands = 0 : i64, tpu.core_type = #tpu.core_type<tc>, window_params = [{transform_indices = @transform_0, window_bounds = array<i64: 8, 256>}, {pipeline_mode = #tpu.pipeline_mode<synchronous>, transform_indices = @transform_1, window_bounds = array<i64: 1, 256>}, {transform_indices = @transform_2, window_bounds = array<i64: 8, 256>}]} {
    %c0 = arith.constant 0 : index
    %c0_0 = arith.constant 0 : index
    %0 = vector.load %arg1[%c0, %c0_0] : memref<8x256xf32, #tpu.memory_space<vmem>>, vector<8x256xf32>
    %c0_1 = arith.constant 0 : index
    %c0_2 = arith.constant 0 : index
    %1 = vector.load %arg2[%c0_1, %c0_2] : memref<1x256xf32, #tpu.memory_space<vmem>>, vector<1x256xf32>
    %2 = vector.broadcast %1 : vector<1x256xf32> to vector<8x256xf32>
    %3 = arith.addf %0, %2 : vector<8x256xf32>
    %c0_3 = arith.constant 0 : index
    %c0_4 = arith.constant 0 : index
    %4 = vector.load %arg3[%c0_3, %c0_4] : memref<8x256xf32, #tpu.memory_space<vmem>>, vector<8x256xf32>
    tpu.vector_store %arg3[%c0_3, %c0_4], %3 {strides = array<i32>} : memref<8x256xf32, #tpu.memory_space<vmem>>, vector<8x256xf32>,
    return
  }
  func.func @transform_0(%arg0: i32) -> (i32, i32) {
    %c0_i32 = arith.constant 0 : i32
    %c0_i32_0 = arith.constant 0 : i32
    return %arg0, %c0_i32 : i32, i32
  }
  func.func @transform_1(%arg0: i32) -> (i32, i32) {
    %c0_i32 = arith.constant 0 : i32
    %c0_i32_0 = arith.constant 0 : i32
    %c0_i32_1 = arith.constant 0 : i32
    return %c0_i32, %c0_i32_0 : i32, i32
  }
  func.func @transform_2(%arg0: i32) -> (i32, i32) {
    %c0_i32 = arith.constant 0 : i32
    %c0_i32_0 = arith.constant 0 : i32
    return %arg0, %c0_i32 : i32, i32
  }
}

</mosaic_0001>

<llo_original>
// kernel: _lambda_.1
$region0: #{_lambda_.1}
  #allocation0 [shape = 'u32[]', space=smem, size = 0x4, offset = 0x4, fixed_abs, tag = 'smem constant byte address 0x4 - core index']
  #allocation1 [shape = 'u32[72,128]{1,0:T(1,128)}', space=vmem, size = 0x9000, scoped, tag = 'internal scratch']
  %s0 = inlined_call_operand.vmem [shape: f32[8,256], index: 0, kind: input, shape index: {}, may-alias: {0,2}]
  %s1 = inlined_call_operand.vmem [shape: f32[1,256], index: 1, kind: input, shape index: {}]
  %s2 = inlined_call_operand.vmem [shape: f32[8,256], index: 2, kind: output, shape index: {}, may-alias: {0,2}]
  %s3 = sld [smem:[#allocation0]]
  $region18: #{_lambda_.1} parent=0
    _
  %s5 = ssub.s32 1, %s3
  %s6 = scalar_select 0, %s5, %s3
  // Predicated region
  $region2: #{_lambda_.1} parent=0 // pred_check
    _
  $region3: #{_lambda_.1} parent=0 // pred_check_branch
    %8 = sbr.rel (0) target = $region5
  $region4: #{_lambda_.1} parent=0 // pred_region
    _
  $region5: #{_lambda_.1} parent=0 // pred_fallthru
    _
  // Predicated region
  $region6: #{_lambda_.1} parent=0 // pred_check
    _
  $region7: #{_lambda_.1} parent=0 // pred_check_branch
    %10 = sbr.rel (0) target = $region9
  $region8: #{_lambda_.1} parent=0 // pred_region
    _
  $region9: #{_lambda_.1} parent=0 // pred_fallthru
    _
  %v11 = vld [vmem:[%s0] sm:$0xff]
  %v12 = vld [vmem:[%s0 + $0x8] sm:$0xff]
  %v13 = vld [vmem:[%s1] sm:$0x3]
  %v15 = vperm.slane %v13, 0
  %v16 = vperm.slane %v13, 1
  %v19 = vadd.f32 %v11, %v15
  %v20 = vadd.f32 %v12, %v16
  %21 = vst [vmem:[%s2] sm:$0xff] %v19
  %22 = vst [vmem:[%s2 + $0x8] sm:$0xff] %v20
  // Predicated region
  $region10: #{_lambda_.1} parent=0 // pred_check
    _
  $region11: #{_lambda_.1} parent=0 // pred_check_branch
    %24 = sbr.rel (0) target = $region13
  $region12: #{_lambda_.1} parent=0 // pred_region
    _
  $region13: #{_lambda_.1} parent=0 // pred_fallthru
    _
  // Predicated region
  $region14: #{_lambda_.1} parent=0 // pred_check
    _
  $region15: #{_lambda_.1} parent=0 // pred_check_branch
    %26 = sbr.rel (0) target = $region17
  $region16: #{_lambda_.1} parent=0 // pred_region
    _
  $region17: #{_lambda_.1} parent=0 // pred_fallthru
    _

</llo_original>
